<compile_context>
chip_gen: v6e
topology: v6e:2x2x1
jax: 0.10.0
libtpu: 0.0.40
codegen_flags: <defaults>
</compile_context>

<pallas_src>
import functools

import jax
import jax.numpy as jnp
from jax.experimental import pallas as pl
from jax.experimental.pallas import tpu as pltpu

INPUT_SIZE = 63
HIDDEN1 = 128
HIDDEN2 = 64
# TODO(synk): num_classes = len(label_map) in the original; label_map is undefined in
# the snippet, so a small synthetic value is used.
NUM_CLASSES = 10

# MXU/lane-aligned padded dims for the weight matrices (zero-padded, math unchanged).
IN_PAD = 128
H1_PAD = 128
H2_PAD = 128
OUT_PAD = 128

LANE = 128
SUBLANE = 8


def _round_up(n, m):
    return ((n + m - 1) // m) * m


def _cdiv(a, b):
    return (a + b - 1) // b


def gesture_mlp_kernel(x_ref, w1_ref, b1_ref, w2_ref, b2_ref, w3_ref, b3_ref,
                       o_ref, xpad_ref):
    """Entire forward (3 matmuls + bias adds + ReLUs) fused in one kernel body.

    x_ref:      (tile, 63)  float32 (un-padded HBM input tile)
    w*_ref:     zero-padded weights in the compute dtype (bf16 or f32)
    b*_ref:     zero-padded biases, f32 (f32 epilogue)
    o_ref:      (tile, NUM_CLASSES) float32 (narrow output)
    xpad_ref:   (tile, 128) VMEM scratch used to lane-pad x inside the kernel
    """
    cdt = w1_ref.dtype  # compute dtype (bf16 fast path / f32 exact path)

    # Zero-pad the 63 input features to 128 lanes entirely in VMEM: zero the padding
    # lanes, then (masked-)store the real features. Keeps the MXU K dim aligned while
    # the HBM read stays at the un-padded 63-wide row.
    tile_rows = xpad_ref.shape[0]
    xpad_ref[:, INPUT_SIZE:] = jnp.zeros((tile_rows, IN_PAD - INPUT_SIZE), cdt)
    xpad_ref[:, :INPUT_SIZE] = x_ref[...].astype(cdt)
    x = xpad_ref[...]

    # Matmuls accumulate in f32 on the MXU; activations go back to the compute dtype
    # between layers (bf16 keeps MXU rate high on v6e/v7x; use f32 params on v5e).
    h1 = jnp.dot(x, w1_ref[...], preferred_element_type=jnp.float32) + b1_ref[...]
    h1 = jnp.maximum(h1, 0.0).astype(cdt)
    h2 = jnp.dot(h1, w2_ref[...], preferred_element_type=jnp.float32) + b2_ref[...]
    h2 = jnp.maximum(h2, 0.0).astype(cdt)
    out = jnp.dot(h2, w3_ref[...], preferred_element_type=jnp.float32) + b3_ref[...]

    # Narrow store: only NUM_CLASSES useful lanes go to HBM (masked vst, but the
    # ~12x byte reduction dominates for this HBM-write-bound kernel).
    o_ref[...] = out[:, :NUM_CLASSES].astype(o_ref.dtype)


def _pad2d(a, rows, cols):
    return jnp.pad(a, ((0, rows - a.shape[0]), (0, cols - a.shape[1])))


def prepare_params(params, compute_dtype=jnp.bfloat16):
    """One-time layout prep (hoisted out of the per-call path).

    Zero-padded w1 rows / w2 cols / w3 rows&cols keep results identical to the
    unpadded math (ReLU(0 + 0) = 0 feeds zero weight rows). Weights are cast to the
    compute dtype; biases stay f32 for the f32 epilogue.
    """
    w1, b1, w2, b2, w3, b3 = params  # logical (in, out) / (1, out) shapes
    w1p = _pad2d(w1, IN_PAD, H1_PAD).astype(compute_dtype)
    w2p = _pad2d(w2, H1_PAD, H2_PAD).astype(compute_dtype)
    w3p = _pad2d(w3, H2_PAD, OUT_PAD).astype(compute_dtype)
    b1p = _pad2d(b1, 1, H1_PAD).astype(jnp.float32)
    b2p = _pad2d(b2, 1, H2_PAD).astype(jnp.float32)
    b3p = _pad2d(b3, 1, OUT_PAD).astype(jnp.float32)
    return (w1p, b1p, w2p, b2p, w3p, b3p)


@functools.partial(jax.jit, static_argnames=("batch_tile",))
def gesture_net_forward(x, padded_params, *, batch_tile=1024):
    """x: (B, 63) float32. padded_params: output of prepare_params.
    Returns logits (B, NUM_CLASSES) float32."""
    w1p, b1p, w2p, b2p, w3p, b3p = padded_params
    B = x.shape[0]

    # Batch tile: multiple of the 8-sublane granularity, large enough to amortize the
    # ~0.35 us per-grid-step overhead, but capped so the grid keeps >= 2 steps
    # (the "parallel" batch axis shards across v7x's two TensorCores).
    tile = min(batch_tile, _round_up(_cdiv(B, 2), SUBLANE))
    tile = max(_round_up(tile, SUBLANE), SUBLANE)
    grid = (_cdiv(B, tile),)  # ragged last block: Pallas masks the overhang writes

    full = lambda a: pl.BlockSpec(a.shape, lambda i: (0,) * a.ndim)  # VMEM-resident

    return pl.pallas_call(
        gesture_mlp_kernel,
        out_shape=jax.ShapeDtypeStruct((B, NUM_CLASSES), jnp.float32),
        grid_spec=pltpu.PrefetchScalarGridSpec(
            num_scalar_prefetch=0,
            grid=grid,
            in_specs=[
                pl.BlockSpec((tile, INPUT_SIZE), lambda i: (i, 0)),  # un-padded x tile
                full(w1p), full(b1p),
                full(w2p), full(b2p),
                full(w3p), full(b3p),
            ],
            out_specs=pl.BlockSpec((tile, NUM_CLASSES), lambda i: (i, 0)),
            scratch_shapes=[pltpu.VMEM((tile, IN_PAD), w1p.dtype)],
        ),
        compiler_params=pltpu.CompilerParams(
            # Batch tiles are independent -> shard across TensorCores (v7x megacore).
            dimension_semantics=("parallel",),
        ),
    )(x, w1p, b1p, w2p, b2p, w3p, b3p)


def init_params(key):
    """Deterministic synthetic parameters matching the PyTorch module's shapes.

    PyTorch nn.Linear(in, out) has weight (out, in); we store the transpose (in, out)
    so the kernel computes x @ W. Biases are kept 2D (1, out).
    """
    keys = jax.random.split(key, 6)

    def linear(kw, kb, fan_in, fan_out):
        bound = 1.0 / jnp.sqrt(fan_in)
        w = jax.random.uniform(kw, (fan_in, fan_out), jnp.float32, -bound, bound)
        b = jax.random.uniform(kb, (1, fan_out), jnp.float32, -bound, bound)
        return w, b

    w1, b1 = linear(keys[0], keys[1], INPUT_SIZE, HIDDEN1)
    w2, b2 = linear(keys[2], keys[3], HIDDEN1, HIDDEN2)
    w3, b3 = linear(keys[4], keys[5], HIDDEN2, NUM_CLASSES)
    return (w1, b1, w2, b2, w3, b3)


def reference_forward(x, params):
    w1, b1, w2, b2, w3, b3 = params
    h1 = jnp.maximum(x @ w1 + b1, 0.0)
    h2 = jnp.maximum(h1 @ w2 + b2, 0.0)
    return h2 @ w3 + b3


if __name__ == "__main__":
    key = jax.random.PRNGKey(0)
    k_x, k_p = jax.random.split(key)

    batch = 64  # small; exercises the grid>=2 split and the narrow-output path
    x = jax.random.normal(k_x, (batch, INPUT_SIZE), dtype=jnp.float32)
    params = init_params(k_p)

    ref = reference_forward(x, params)

    # f32 compute path: exact same math as the reference (zero padding only).
    pp_f32 = prepare_params(params, compute_dtype=jnp.float32)
    logits_f32 = jax.block_until_ready(gesture_net_forward(x, pp_f32))
    assert logits_f32.shape == (batch, NUM_CLASSES)
    assert jnp.allclose(logits_f32, ref, atol=1e-4, rtol=1e-4), "f32 Pallas mismatch vs reference"

    # bf16 operands / f32 MXU accumulation: high-throughput path for v6e/v7x.
    # (On v5e, prefer the f32 params above — no native bf16 VPU there.)
    pp_bf16 = prepare_params(params, compute_dtype=jnp.bfloat16)
    logits_bf16 = jax.block_until_ready(gesture_net_forward(x, pp_bf16))
    assert logits_bf16.shape == (batch, NUM_CLASSES)
    assert jnp.allclose(logits_bf16, ref, atol=5e-2, rtol=5e-2), "bf16 Pallas mismatch vs reference"

    print("KERNEL_OK")
</pallas_src>

<mosaic_0001>
module attributes {stable_mosaic.version = 11 : i64} {
  func.func @gesture_mlp_kernel(%arg0: i32, %arg1: memref<32x63xf32, #tpu.memory_space<vmem>>, %arg2: memref<128x128xf32, #tpu.memory_space<vmem>>, %arg3: memref<1x128xf32, #tpu.memory_space<vmem>>, %arg4: memref<128x128xf32, #tpu.memory_space<vmem>>, %arg5: memref<1x128xf32, #tpu.memory_space<vmem>>, %arg6: memref<128x128xf32, #tpu.memory_space<vmem>>, %arg7: memref<1x128xf32, #tpu.memory_space<vmem>>, %arg8: memref<32x10xf32, #tpu.memory_space<vmem>>, %arg9: memref<32x128xf32, #tpu.memory_space<vmem>>) attributes {dimension_semantics = [#tpu.dimension_semantics<parallel>], iteration_bounds = array<i64: 2>, scalar_prefetch = 0 : i64, scratch_operands = 1 : i64, tpu.core_type = #tpu.core_type<tc>, window_params = [{transform_indices = @transform_0, window_bounds = array<i64: 32, 63>}, {pipeline_mode = #tpu.pipeline_mode<synchronous>, transform_indices = @transform_1, window_bounds = array<i64: 128, 128>}, {pipeline_mode = #tpu.pipeline_mode<synchronous>, transform_indices = @transform_2, window_bounds = array<i64: 1, 128>}, {pipeline_mode = #tpu.pipeline_mode<synchronous>, transform_indices = @transform_3, window_bounds = array<i64: 128, 128>}, {pipeline_mode = #tpu.pipeline_mode<synchronous>, transform_indices = @transform_4, window_bounds = array<i64: 1, 128>}, {pipeline_mode = #tpu.pipeline_mode<synchronous>, transform_indices = @transform_5, window_bounds = array<i64: 128, 128>}, {pipeline_mode = #tpu.pipeline_mode<synchronous>, transform_indices = @transform_6, window_bounds = array<i64: 1, 128>}, {transform_indices = @transform_7, window_bounds = array<i64: 32, 10>}]} {
    %cst = arith.constant 0.000000e+00 : f32
    %0 = vector.broadcast %cst : f32 to vector<32x65xf32>
    %c0 = arith.constant 0 : index
    %c63 = arith.constant 63 : index
    %1 = vector.load %arg9[%c0, %c63] : memref<32x128xf32, #tpu.memory_space<vmem>>, vector<32x65xf32>
    tpu.vector_store %arg9[%c0, %c63], %0 {strides = array<i32>} : memref<32x128xf32, #tpu.memory_space<vmem>>, vector<32x65xf32>,
    %c0_0 = arith.constant 0 : index
    %c0_1 = arith.constant 0 : index
    %2 = vector.load %arg1[%c0_0, %c0_1] : memref<32x63xf32, #tpu.memory_space<vmem>>, vector<32x63xf32>
    %c0_2 = arith.constant 0 : index
    %c0_3 = arith.constant 0 : index
    %3 = vector.load %arg9[%c0_2, %c0_3] : memref<32x128xf32, #tpu.memory_space<vmem>>, vector<32x63xf32>
    tpu.vector_store %arg9[%c0_2, %c0_3], %2 {strides = array<i32>} : memref<32x128xf32, #tpu.memory_space<vmem>>, vector<32x63xf32>,
    %c0_4 = arith.constant 0 : index
    %c0_5 = arith.constant 0 : index
    %4 = vector.load %arg9[%c0_4, %c0_5] : memref<32x128xf32, #tpu.memory_space<vmem>>, vector<32x128xf32>
    %c0_6 = arith.constant 0 : index
    %c0_7 = arith.constant 0 : index
    %5 = vector.load %arg2[%c0_6, %c0_7] : memref<128x128xf32, #tpu.memory_space<vmem>>, vector<128x128xf32>
    %cst_8 = arith.constant dense<0.000000e+00> : vector<32x128xf32>
    %6 = tpu.matmul %4, %5, %cst_8 {dimension_numbers = #tpu.dot_dimension_numbers<[1], [0], [0], [1], [0, 0, 1, 1], [], []>} : vector<32x128xf32>, vector<128x128xf32>, vector<32x128xf32> -> vector<32x128xf32>
    %c0_9 = arith.constant 0 : index
    %c0_10 = arith.constant 0 : index
    %7 = vector.load %arg3[%c0_9, %c0_10] : memref<1x128xf32, #tpu.memory_space<vmem>>, vector<1x128xf32>
    %8 = vector.broadcast %7 : vector<1x128xf32> to vector<32x128xf32>
    %9 = arith.addf %6, %8 : vector<32x128xf32>
    %cst_11 = arith.constant 0.000000e+00 : f32
    %10 = vector.broadcast %cst_11 : f32 to vector<32x128xf32>
    %11 = arith.maximumf %9, %10 : vector<32x128xf32>
    %c0_12 = arith.constant 0 : index
    %c0_13 = arith.constant 0 : index
    %12 = vector.load %arg4[%c0_12, %c0_13] : memref<128x128xf32, #tpu.memory_space<vmem>>, vector<128x128xf32>
    %cst_14 = arith.constant dense<0.000000e+00> : vector<32x128xf32>
    %13 = tpu.matmul %11, %12, %cst_14 {dimension_numbers = #tpu.dot_dimension_numbers<[1], [0], [0], [1], [0, 0, 1, 1], [], []>} : vector<32x128xf32>, vector<128x128xf32>, vector<32x128xf32> -> vector<32x128xf32>
    %c0_15 = arith.constant 0 : index
    %c0_16 = arith.constant 0 : index
    %14 = vector.load %arg5[%c0_15, %c0_16] : memref<1x128xf32, #tpu.memory_space<vmem>>, vector<1x128xf32>
    %15 = vector.broadcast %14 : vector<1x128xf32> to vector<32x128xf32>
    %16 = arith.addf %13, %15 : vector<32x128xf32>
    %cst_17 = arith.constant 0.000000e+00 : f32
    %17 = vector.broadcast %cst_17 : f32 to vector<32x128xf32>
    %18 = arith.maximumf %16, %17 : vector<32x128xf32>
    %c0_18 = arith.constant 0 : index
    %c0_19 = arith.constant 0 : index
    %19 = vector.load %arg6[%c0_18, %c0_19] : memref<128x128xf32, #tpu.memory_space<vmem>>, vector<128x128xf32>
    %cst_20 = arith.constant dense<0.000000e+00> : vector<32x128xf32>
    %20 = tpu.matmul %18, %19, %cst_20 {dimension_numbers = #tpu.dot_dimension_numbers<[1], [0], [0], [1], [0, 0, 1, 1], [], []>} : vector<32x128xf32>, vector<128x128xf32>, vector<32x128xf32> -> vector<32x128xf32>
    %c0_21 = arith.constant 0 : index
    %c0_22 = arith.constant 0 : index
    %21 = vector.load %arg7[%c0_21, %c0_22] : memref<1x128xf32, #tpu.memory_space<vmem>>, vector<1x128xf32>
    %22 = vector.broadcast %21 : vector<1x128xf32> to vector<32x128xf32>
    %23 = arith.addf %20, %22 : vector<32x128xf32>
    %24 = vector.extract_strided_slice %23 {offsets = [0, 0], sizes = [32, 10], strides = [1, 1]} : vector<32x128xf32> to vector<32x10xf32>
    %c0_23 = arith.constant 0 : index
    %c0_24 = arith.constant 0 : index
    %25 = vector.load %arg8[%c0_23, %c0_24] : memref<32x10xf32, #tpu.memory_space<vmem>>, vector<32x10xf32>
    tpu.vector_store %arg8[%c0_23, %c0_24], %24 {strides = array<i32>} : memref<32x10xf32, #tpu.memory_space<vmem>>, vector<32x10xf32>,
    return
  }
  func.func @transform_0(%arg0: i32) -> (i32, i32) {
    %c0_i32 = arith.constant 0 : i32
    %c0_i32_0 = arith.constant 0 : i32
    return %arg0, %c0_i32 : i32, i32
  }
  func.func @transform_1(%arg0: i32) -> (i32, i32) {
    %c0_i32 = arith.constant 0 : i32
    %c0_i32_0 = arith.constant 0 : i32
    %c0_i32_1 = arith.constant 0 : i32
    return %c0_i32, %c0_i32_0 : i32, i32
  }
  func.func @transform_2(%arg0: i32) -> (i32, i32) {
    %c0_i32 = arith.constant 0 : i32
    %c0_i32_0 = arith.constant 0 : i32
    %c0_i32_1 = arith.constant 0 : i32
    return %c0_i32, %c0_i32_0 : i32, i32
  }
  func.func @transform_3(%arg0: i32) -> (i32, i32) {
    %c0_i32 = arith.constant 0 : i32
    %c0_i32_0 = arith.constant 0 : i32
    %c0_i32_1 = arith.constant 0 : i32
    return %c0_i32, %c0_i32_0 : i32, i32
  }
  func.func @transform_4(%arg0: i32) -> (i32, i32) {
    %c0_i32 = arith.constant 0 : i32
    %c0_i32_0 = arith.constant 0 : i32
    %c0_i32_1 = arith.constant 0 : i32
    return %c0_i32, %c0_i32_0 : i32, i32
  }
  func.func @transform_5(%arg0: i32) -> (i32, i32) {
    %c0_i32 = arith.constant 0 : i32
    %c0_i32_0 = arith.constant 0 : i32
    %c0_i32_1 = arith.constant 0 : i32
    return %c0_i32, %c0_i32_0 : i32, i32
  }
  func.func @transform_6(%arg0: i32) -> (i32, i32) {
    %c0_i32 = arith.constant 0 : i32
    %c0_i32_0 = arith.constant 0 : i32
    %c0_i32_1 = arith.constant 0 : i32
    return %c0_i32, %c0_i32_0 : i32, i32
  }
  func.func @transform_7(%arg0: i32) -> (i32, i32) {
    %c0_i32 = arith.constant 0 : i32
    %c0_i32_0 = arith.constant 0 : i32
    return %arg0, %c0_i32 : i32, i32
  }
}

</mosaic_0001>

<llo_original>
// kernel: gesture_net_forward.1
$region0: #{gesture_net_forward.1}
  #allocation0 [shape = 'u32[]', space=smem, size = 0x4, offset = 0x4, fixed_abs, tag = 'smem constant byte address 0x4 - core index']
  #allocation1 [shape = 'u32[144,128]{1,0:T(1,128)}', space=vmem, size = 0x12000, scoped, tag = 'internal scratch']
  #allocation2 [shape = 'f32[32,128]{1,0:T(8,128)}', space=vmem, size = 0x4000, scoped, tag = 'scratch operand']
  %s0 = inlined_call_operand.hbm [shape: f32[64,63], index: 0, kind: input, shape index: {}]
  %s1 = inlined_call_operand.hbm [shape: f32[128,128], index: 1, kind: input, shape index: {}]
  %s2 = inlined_call_operand.vmem [shape: f32[1,128], index: 2, kind: input, shape index: {}]
  %s3 = inlined_call_operand.hbm [shape: f32[128,128], index: 3, kind: input, shape index: {}]
  %s4 = inlined_call_operand.vmem [shape: f32[1,128], index: 4, kind: input, shape index: {}]
  %s5 = inlined_call_operand.hbm [shape: f32[128,128], index: 5, kind: input, shape index: {}]
  %s6 = inlined_call_operand.vmem [shape: f32[1,128], index: 6, kind: input, shape index: {}]
  %s7 = inlined_call_operand.vmem [shape: f32[64,10], index: 7, kind: output, shape index: {}]
  %s8 = sld [smem:[#allocation0]]
  $region77: #{gesture_net_forward.1} parent=0
    _
  %s10 = ssub.s32 1, %s8
  %s11 = scalar_select 0, %s10, %s8
  $region1: #{gesture_net_forward.1} parent=0
    #allocation3 [shape = 'u8[32768]{0}', space=vmem, size = 0x8000, scoped, tag = 'input window, operand 0']
    #allocation4 [shape = 's32[2]{0}', space=sflag, size = 0x8, scoped, tag = 'scoped memory for gesture_net_forward.1']
    #allocation5 [shape = 'u8[65536]{0}', space=vmem, size = 0x10000, scoped, tag = 'input window, operand 1, single buffered']
    #allocation6 [shape = 's32[1]{0}', space=sflag, size = 0x4, scoped, tag = 'scoped memory for gesture_net_forward.1']
    #allocation7 [shape = 'u8[65536]{0}', space=vmem, size = 0x10000, scoped, tag = 'input window, operand 3, single buffered']
    #allocation8 [shape = 'u8[65536]{0}', space=vmem, size = 0x10000, scoped, tag = 'input window, operand 5, single buffered']
    #allocation9 [shape = 's32[1]{0}', space=sflag, size = 0x4, scoped, tag = 'scoped memory for gesture_net_forward.1']
    %12 = vsyncpa [#allocation4], 0
    %s13 = scalar_lea.sflag [#allocation4], 1
    %14 = vsyncpa %s13, 0
    %15 = vsyncpa [#allocation6], 0
    %16 = vsyncpa [#allocation9], 0
    loop: start=0, step=1, limit=4
    $region2: #{gesture_net_forward.1} parent=1 // loop_pre_header
      _
    $region3: #{gesture_net_forward.1} parent=1 // loop_header
      %s18 = sphi 0, %s22
      %p19 = scmp.ge.s32.totalorder %s18, 4
      %s28 = sphi 0, %s30
      %s31 = sphi 0, %s28
      %s32 = sphi 0, %s31
      %s48 = sphi 0, %s32
      %s52 = sphi 0, %s52
      %s54 = sphi 0, %s52
      %s55 = sphi 0, %s54
      %s69 = sphi 0, %s55
      %s73 = sphi 0, %s73
      %s75 = sphi 0, %s73
      %s76 = sphi 0, %s75
      %s90 = sphi 0, %s76
      %s94 = sphi 0, %s94
      %s96 = sphi 0, %s94
      %s97 = sphi 0, %s96
      %s111 = sphi 0, %s97
      %s115 = sphi 0, %s115
      %s117 = sphi 0, %s115
      %s118 = sphi 0, %s117
      %s132 = sphi 0, %s118
      %s136 = sphi 0, %s136
      %s138 = sphi 0, %s136
      %s139 = sphi 0, %s138
      %s153 = sphi 0, %s139
      %s157 = sphi 0, %s157
      %s159 = sphi 0, %s157
      %s160 = sphi 0, %s159
      %s174 = sphi 0, %s160
      %s180 = sphi 0, %s182
      %s183 = sphi 0, %s180
      %s184 = sphi 0, %s183
      %s200 = sphi 0, %s184
    $region4: #{gesture_net_forward.1} parent=1 // loop_header_branch
      %21 = sbr.rel (%p19) target = $region8
    $region5: #{gesture_net_forward.1} parent=1 // loop_body
      %s23 = ssub.s32 %s18, 1
      %s24 = ssub.s32 %s18, 2
      %s25 = sadd.s32 %s18, 1
      %s26 = ssub.s32 %s18, %s25
      %p27 = scmp.eq.s32.totalorder %s26, 0
      %s29 = sadd.s32 %s28, 1
      %s30 = scalar_select %p27, %s28, %s29
      %p33 = pneg %p27
      %p34 = scmp.eq.s32.totalorder %s18, 1
      %p35 = por %p33, %p34
      %p36 = scmp.ne.s32.totalorder %s28, %s31
      %p37 = scmp.eq.s32.totalorder %s18, 0
      %p38 = por %p36, %p37
      %p39 = scmp.ne.s32.totalorder %s28, %s31
      %p40 = scmp.eq.s32.totalorder %s23, 1
      %p41 = por %p39, %p40
      %p42 = scmp.ne.s32.totalorder %s31, %s32
      %p43 = scmp.eq.s32.totalorder %s23, 0
      %p44 = por %p42, %p43
      %p45 = scmp.ne.s32.totalorder %s31, %s32
      %p46 = scmp.eq.s32.totalorder %s24, 1
      %p47 = por %p45, %p46
      %p49 = scmp.ne.s32.totalorder %s32, %s48
      %p50 = scmp.eq.s32.totalorder %s24, 0
      %p51 = por %p49, %p50
      %s53 = sadd.s32 %s52, 1
      %p56 = scmp.eq.s32.totalorder %s18, 1
      %p57 = scmp.ne.s32.totalorder %s52, %s54
      %p58 = scmp.eq.s32.totalorder %s18, 0
      %p59 = por %p57, %p58
      %p60 = scmp.ne.s32.totalorder %s52, %s54
      %p61 = scmp.eq.s32.totalorder %s23, 1
      %p62 = por %p60, %p61
      %p63 = scmp.ne.s32.totalorder %s54, %s55
      %p64 = scmp.eq.s32.totalorder %s23, 0
      %p65 = por %p63, %p64
      %p66 = scmp.ne.s32.totalorder %s54, %s55
      %p67 = scmp.eq.s32.totalorder %s24, 1
      %p68 = por %p66, %p67
      %p70 = scmp.ne.s32.totalorder %s55, %s69
      %p71 = scmp.eq.s32.totalorder %s24, 0
      %p72 = por %p70, %p71
      %s74 = sadd.s32 %s73, 1
      %p77 = scmp.eq.s32.totalorder %s18, 1
      %p78 = scmp.ne.s32.totalorder %s73, %s75
      %p79 = scmp.eq.s32.totalorder %s18, 0
      %p80 = por %p78, %p79
      %p81 = scmp.ne.s32.totalorder %s73, %s75
      %p82 = scmp.eq.s32.totalorder %s23, 1
      %p83 = por %p81, %p82
      %p84 = scmp.ne.s32.totalorder %s75, %s76
      %p85 = scmp.eq.s32.totalorder %s23, 0
      %p86 = por %p84, %p85
      %p87 = scmp.ne.s32.totalorder %s75, %s76
      %p88 = scmp.eq.s32.totalorder %s24, 1
      %p89 = por %p87, %p88
      %p91 = scmp.ne.s32.totalorder %s76, %s90
      %p92 = scmp.eq.s32.totalorder %s24, 0
      %p93 = por %p91, %p92
      %s95 = sadd.s32 %s94, 1
      %p98 = scmp.eq.s32.totalorder %s18, 1
      %p99 = scmp.ne.s32.totalorder %s94, %s96
      %p100 = scmp.eq.s32.totalorder %s18, 0
      %p101 = por %p99, %p100
      %p102 = scmp.ne.s32.totalorder %s94, %s96
      %p103 = scmp.eq.s32.totalorder %s23, 1
      %p104 = por %p102, %p103
      %p105 = scmp.ne.s32.totalorder %s96, %s97
      %p106 = scmp.eq.s32.totalorder %s23, 0
      %p107 = por %p105, %p106
      %p108 = scmp.ne.s32.totalorder %s96, %s97
      %p109 = scmp.eq.s32.totalorder %s24, 1
      %p110 = por %p108, %p109
      %p112 = scmp.ne.s32.totalorder %s97, %s111
      %p113 = scmp.eq.s32.totalorder %s24, 0
      %p114 = por %p112, %p113
      %s116 = sadd.s32 %s115, 1
      %p119 = scmp.eq.s32.totalorder %s18, 1
      %p120 = scmp.ne.s32.totalorder %s115, %s117
      %p121 = scmp.eq.s32.totalorder %s18, 0
      %p122 = por %p120, %p121
      %p123 = scmp.ne.s32.totalorder %s115, %s117
      %p124 = scmp.eq.s32.totalorder %s23, 1
      %p125 = por %p123, %p124
      %p126 = scmp.ne.s32.totalorder %s117, %s118
      %p127 = scmp.eq.s32.totalorder %s23, 0
      %p128 = por %p126, %p127
      %p129 = scmp.ne.s32.totalorder %s117, %s118
      %p130 = scmp.eq.s32.totalorder %s24, 1
      %p131 = por %p129, %p130
      %p133 = scmp.ne.s32.totalorder %s118, %s132
      %p134 = scmp.eq.s32.totalorder %s24, 0
      %p135 = por %p133, %p134
      %s137 = sadd.s32 %s136, 1
      %p140 = scmp.eq.s32.totalorder %s18, 1
      %p141 = scmp.ne.s32.totalorder %s136, %s138
      %p142 = scmp.eq.s32.totalorder %s18, 0
      %p143 = por %p141, %p142
      %p144 = scmp.ne.s32.totalorder %s136, %s138
      %p145 = scmp.eq.s32.totalorder %s23, 1
      %p146 = por %p144, %p145
      %p147 = scmp.ne.s32.totalorder %s138, %s139
      %p148 = scmp.eq.s32.totalorder %s23, 0
      %p149 = por %p147, %p148
      %p150 = scmp.ne.s32.totalorder %s138, %s139
      %p151 = scmp.eq.s32.totalorder %s24, 1
      %p152 = por %p150, %p151
      %p154 = scmp.ne.s32.totalorder %s139, %s153
      %p155 = scmp.eq.s32.totalorder %s24, 0
      %p156 = por %p154, %p155
      %s158 = sadd.s32 %s157, 1
      %p161 = scmp.eq.s32.totalorder %s18, 1
      %p162 = scmp.ne.s32.totalorder %s157, %s159
      %p163 = scmp.eq.s32.totalorder %s18, 0
      %p164 = por %p162, %p163
      %p165 = scmp.ne.s32.totalorder %s157, %s159
      %p166 = scmp.eq.s32.totalorder %s23, 1
      %p167 = por %p165, %p166
      %p168 = scmp.ne.s32.totalorder %s159, %s160
      %p169 = scmp.eq.s32.totalorder %s23, 0
      %p170 = por %p168, %p169
      %p171 = scmp.ne.s32.totalorder %s159, %s160
      %p172 = scmp.eq.s32.totalorder %s24, 1
      %p173 = por %p171, %p172
      %p175 = scmp.ne.s32.totalorder %s160, %s174
      %p176 = scmp.eq.s32.totalorder %s24, 0
      %p177 = por %p175, %p176
      %s178 = ssub.s32 %s18, %s25
      %p179 = scmp.eq.s32.totalorder %s178, 0
      %s181 = sadd.s32 %s180, 1
      %s182 = scalar_select %p179, %s180, %s181
      %p185 = pneg %p179
      %p186 = scmp.eq.s32.totalorder %s18, 1
      %p187 = por %p185, %p186
      %p188 = scmp.ne.s32.totalorder %s180, %s183
      %p189 = scmp.eq.s32.totalorder %s18, 0
      %p190 = por %p188, %p189
      %p191 = scmp.ne.s32.totalorder %s180, %s183
      %p192 = scmp.eq.s32.totalorder %s23, 1
      %p193 = por %p191, %p192
      %p194 = scmp.ne.s32.totalorder %s183, %s184
      %p195 = scmp.eq.s32.totalorder %s23, 0
      %p196 = por %p194, %p195
      %p197 = scmp.ne.s32.totalorder %s183, %s184
      %p198 = scmp.eq.s32.totalorder %s24, 1
      %p199 = por %p197, %p198
      %p201 = scmp.ne.s32.totalorder %s184, %s200
      %p202 = scmp.eq.s32.totalorder %s24, 0
      %p203 = por %p201, %p202
      %p204 = scmp.le.s32.totalorder 1, %s18
      %p205 = scmp.lt.s32.totalorder %s18, 3
      %p206 = pnand %p204, %p205
      %p207 = pneg %p206
      // Predicated region
      $region9: #{gesture_net_forward.1} parent=5 // pred_check
        _
      $region10: #{gesture_net_forward.1} parent=5 // pred_check_branch
        %209 = sbr.rel (%p206) target = $region12
      $region11: #{gesture_net_forward.1} parent=5 // pred_region
        %s210 = ssub.s32 %s18, 1
        // Predicated region
        $region13: #{gesture_net_forward.1} parent=11 // pred_check
          %p211 = pneg %p65
        $region14: #{gesture_net_forward.1} parent=11 // pred_check_branch
          %213 = sbr.rel (%p211) target = $region16
        $region15: #{gesture_net_forward.1} parent=11 // pred_region
          %s215 = ssub.s32 2048, 2048
          %216 = vsyncadd [#allocation6], %s215
          %s217 = sshll.u32 [#allocation5], 4
          %s218 = int_to_ptr.vmem [resolvable:$true] %s217
          %223 = dma.hbm_to_vmem [thread:$0]  %s1, 2048, %s218, [#allocation6], 128, 128, 8
        $region16: #{gesture_net_forward.1} parent=11 // pred_fallthru
          _
        // Predicated region
        $region17: #{gesture_net_forward.1} parent=11 // pred_check
          %p224 = pneg %p86
        $region18: #{gesture_net_forward.1} parent=11 // pred_check_branch
          %226 = sbr.rel (%p224) target = $region20
        $region19: #{gesture_net_forward.1} parent=11 // pred_region
          _
        $region20: #{gesture_net_forward.1} parent=11 // pred_fallthru
          _
        // Predicated region
        $region21: #{gesture_net_forward.1} parent=11 // pred_check
          %p227 = pneg %p107
        $region22: #{gesture_net_forward.1} parent=11 // pred_check_branch
          %229 = sbr.rel (%p227) target = $region24
        $region23: #{gesture_net_forward.1} parent=11 // pred_region
          %s231 = ssub.s32 2048, 2048
          %232 = vsyncadd [#allocation6], %s231
          %s233 = sshll.u32 [#allocation7], 4
          %s234 = int_to_ptr.vmem [resolvable:$true] %s233
          %239 = dma.hbm_to_vmem [thread:$0]  %s3, 2048, %s234, [#allocation6], 128, 128, 8
        $region24: #{gesture_net_forward.1} parent=11 // pred_fallthru
          _
        // Predicated region
        $region25: #{gesture_net_forward.1} parent=11 // pred_check
          %p240 = pneg %p128
        $region26: #{gesture_net_forward.1} parent=11 // pred_check_branch
          %242 = sbr.rel (%p240) target = $region28
        $region27: #{gesture_net_forward.1} parent=11 // pred_region
          _
        $region28: #{gesture_net_forward.1} parent=11 // pred_fallthru
          _
        // Predicated region
        $region29: #{gesture_net_forward.1} parent=11 // pred_check
          %p243 = pneg %p149
        $region30: #{gesture_net_forward.1} parent=11 // pred_check_branch
          %245 = sbr.rel (%p243) target = $region32
        $region31: #{gesture_net_forward.1} parent=11 // pred_region
          %s247 = ssub.s32 2048, 2048
          %248 = vsyncadd [#allocation9], %s247
          %s249 = sshll.u32 [#allocation8], 4
          %s250 = int_to_ptr.vmem [resolvable:$true] %s249
          %255 = dma.hbm_to_vmem [thread:$0]  %s5, 2048, %s250, [#allocation9], 128, 128, 8
        $region32: #{gesture_net_forward.1} parent=11 // pred_fallthru
          _
        // Predicated region
        $region33: #{gesture_net_forward.1} parent=11 // pred_check
          %p256 = pneg %p170
        $region34: #{gesture_net_forward.1} parent=11 // pred_check_branch
          %258 = sbr.rel (%p256) target = $region36
        $region35: #{gesture_net_forward.1} parent=11 // pred_region
          _
        $region36: #{gesture_net_forward.1} parent=11 // pred_fallthru
          _
      $region12: #{gesture_net_forward.1} parent=5 // pred_fallthru
        _
      %p259 = scmp.lt.s32.totalorder %s18, 2
      // Predicated region
      $region37: #{gesture_net_forward.1} parent=5 // pred_check
        %p260 = pneg %p259
      $region38: #{gesture_net_forward.1} parent=5 // pred_check_branch
        %262 = sbr.rel (%p260) target = $region40
      $region39: #{gesture_net_forward.1} parent=5 // pred_region
        // Predicated region
        $region41: #{gesture_net_forward.1} parent=39 // pred_check
          %p263 = pneg %p38
        $region42: #{gesture_net_forward.1} parent=39 // pred_check_branch
          %265 = sbr.rel (%p263) target = $region44
        $region43: #{gesture_net_forward.1} parent=39 // pred_region
          %s266 = sand.u32 %s28, 1
          %s267 = scalar_lea.sflag [#allocation4], %s266
          %s268 = sand.u32 %s28, 1
          %s269 = smul.addr %s268, 32
          %s270 = scalar_lea.vmem [#allocation3], %s269
          %s271 = smul.u32 4, %s18
          %s273 = ssub.s32 512, 512
          %274 = vsyncadd %s267, %s273
          %s275 = smul.addr %s271, 128
          %s276 = scalar_lea.hbm %s0, %s275
          %s277 = sshll.u32 %s270, 4
          %s278 = int_to_ptr.vmem [resolvable:$true] %s277
          %283 = dma.hbm_to_vmem [thread:$0]  %s276, 512, %s278, %s267, 128, 128, 8
        $region44: #{gesture_net_forward.1} parent=39 // pred_fallthru
          _
      $region40: #{gesture_net_forward.1} parent=5 // pred_fallthru
        _
      %p284 = scmp.le.s32.totalorder 1, %s18
      %p285 = scmp.lt.s32.totalorder %s18, 3
      %p286 = pnand %p284, %p285
      %p287 = pneg %p286
      // Predicated region
      $region45: #{gesture_net_forward.1} parent=5 // pred_check
        _
      $region46: #{gesture_net_forward.1} parent=5 // pred_check_branch
        %289 = sbr.rel (%p286) target = $region48
      $region47: #{gesture_net_forward.1} parent=5 // pred_region
        %s290 = ssub.s32 %s18, 1
        %s291 = sand.u32 %s31, 1
        %s292 = scalar_lea.sflag [#allocation4], %s291
        %s293 = sand.u32 %s31, 1
        %s294 = smul.addr %s293, 32
        %s295 = scalar_lea.vmem [#allocation3], %s294
        // Predicated region
        $region49: #{gesture_net_forward.1} parent=47 // pred_check
          %p296 = pneg %p44
        $region50: #{gesture_net_forward.1} parent=47 // pred_check_branch
          %298 = sbr.rel (%p296) target = $region52
        $region51: #{gesture_net_forward.1} parent=47 // pred_region
          %299 = dma.done %s292, 512
        $region52: #{gesture_net_forward.1} parent=47 // pred_fallthru
          _
        // Predicated region
        $region53: #{gesture_net_forward.1} parent=47 // pred_check
          %p300 = pneg %p65
        $region54: #{gesture_net_forward.1} parent=47 // pred_check_branch
          %302 = sbr.rel (%p300) target = $region56
        $region55: #{gesture_net_forward.1} parent=47 // pred_region
          %303 = dma.done [#allocation6], 2048
        $region56: #{gesture_net_forward.1} parent=47 // pred_fallthru
          _
        // Predicated region
        $region57: #{gesture_net_forward.1} parent=47 // pred_check
          %p304 = pneg %p107
        $region58: #{gesture_net_forward.1} parent=47 // pred_check_branch
          %306 = sbr.rel (%p304) target = $region60
        $region59: #{gesture_net_forward.1} parent=47 // pred_region
          %307 = dma.done [#allocation6], 2048
        $region60: #{gesture_net_forward.1} parent=47 // pred_fallthru
          _
        // Predicated region
        $region61: #{gesture_net_forward.1} parent=47 // pred_check
          %p308 = pneg %p149
        $region62: #{gesture_net_forward.1} parent=47 // pred_check_branch
          %310 = sbr.rel (%p308) target = $region64
        $region63: #{gesture_net_forward.1} parent=47 // pred_region
          %311 = dma.done [#allocation9], 2048
        $region64: #{gesture_net_forward.1} parent=47 // pred_fallthru
          _
        %s312 = sand.u32 %s31, 1
        %s313 = scalar_lea.sflag [#allocation4], %s312
        %s314 = sand.u32 %s31, 1
        %s315 = smul.addr %s314, 32
        %s316 = scalar_lea.vmem [#allocation3], %s315
        %p317 = pneg %p44
        %p318 = pneg %p41
        %p319 = pneg %p65
        %p320 = pneg %p62
        %p321 = pneg %p86
        %p322 = pneg %p83
        %p323 = pneg %p107
        %p324 = pneg %p104
        %p325 = pneg %p128
        %p326 = pneg %p125
        %p327 = pneg %p149
        %p328 = pneg %p146
        %p329 = pneg %p170
        %p330 = pneg %p167
        %p331 = pneg %p196
        %p332 = pneg %p193
        %s333 = smul.u32 4, %s23
        %p334 = scmp.lt.s32.totalorder %s333, 7
        %s335 = scalar_select %p334, %s333, 7
        %s336 = smul.addr %s335, 8
        %s337 = scalar_lea.vmem %s7, %s336
        %s338 = smul.u32 4, %s23
        %s339 = smul.u32 4, %s23
        %p340 = scmp.lt.s32.totalorder %s339, 7
        %s341 = scalar_select %p340, %s339, 7
        %s342 = smul.addr %s341, 8
        %s343 = scalar_lea.vmem %s7, %s342
        %s344 = smul.u32 4, %s23
        %vm345 = vcmask 1048056
        %346 = vst.msk [vmem:[#allocation2] sm:$0xff] %vm345, 0.0
        %347 = vst.msk [vmem:[#allocation2 + $0x8] sm:$0xff] %vm345, 0.0
        %348 = vst.msk [vmem:[#allocation2 + $0x10] sm:$0xff] %vm345, 0.0
        %349 = vst.msk [vmem:[#allocation2 + $0x18] sm:$0xff] %vm345, 0.0
        %v350 = vld [vmem:[%s295] sm:$0xff]
        %v351 = vld [vmem:[%s295 + $0x8] sm:$0xff]
        %v352 = vld [vmem:[%s295 + $0x10] sm:$0xff]
        %v353 = vld [vmem:[%s295 + $0x18] sm:$0xff]
        %vm354 = vcmask 515072
        %355 = vst.msk [vmem:[#allocation2] sm:$0xff] %vm354, %v350
        %356 = vst.msk [vmem:[#allocation2 + $0x8] sm:$0xff] %vm354, %v351
        %357 = vst.msk [vmem:[#allocation2 + $0x10] sm:$0xff] %vm354, %v352
        %358 = vst.msk [vmem:[#allocation2 + $0x18] sm:$0xff] %vm354, %v353
        %v359 = vld [vmem:[#allocation2] sm:$0xff]
        %v360 = vld [vmem:[#allocation2 + $0x8] sm:$0xff]
        %v361 = vld [vmem:[#allocation2 + $0x10] sm:$0xff]
        %v362 = vld [vmem:[#allocation2 + $0x18] sm:$0xff]
        %v363 = vld [vmem:[#allocation5] sm:$0xff]
        %v364 = vld [vmem:[#allocation5 + $0x8] sm:$0xff]
        %v365 = vld [vmem:[#allocation5 + $0x10] sm:$0xff]
        %v366 = vld [vmem:[#allocation5 + $0x18] sm:$0xff]
        %v367 = vld [vmem:[#allocation5 + $0x20] sm:$0xff]
        %v368 = vld [vmem:[#allocation5 + $0x28] sm:$0xff]
        %v369 = vld [vmem:[#allocation5 + $0x30] sm:$0xff]
        %v370 = vld [vmem:[#allocation5 + $0x38] sm:$0xff]
        %v371 = vld [vmem:[#allocation5 + $0x40] sm:$0xff]
        %v372 = vld [vmem:[#allocation5 + $0x48] sm:$0xff]
        %v373 = vld [vmem:[#allocation5 + $0x50] sm:$0xff]
        %v374 = vld [vmem:[#allocation5 + $0x58] sm:$0xff]
        %v375 = vld [vmem:[#allocation5 + $0x60] sm:$0xff]
        %v376 = vld [vmem:[#allocation5 + $0x68] sm:$0xff]
        %v377 = vld [vmem:[#allocation5 + $0x70] sm:$0xff]
        %v378 = vld [vmem:[#allocation5 + $0x78] sm:$0xff]
        %v379 = vld [vmem:[%s2] sm:$0x1]
        %v381 = vlaneseq
        %v382 = vshrl.u32 %v381, 7
        %v383 = vsub.s32 0, %v382
        %v384 = vrot.slane %v379, %v383
        %386 = vmatprep.subr.mxu0 0.0
        %387 = vmatpush1.msra.mxu0 %v378
        %388 = vmatprep.subr.mxu0 0.0
        %389 = vmatpush1.msra.mxu0 %v377
        %390 = vmatprep.subr.mxu0 0.0
        %391 = vmatpush1.msra.mxu0 %v376
        %392 = vmatprep.subr.mxu0 0.0
        %393 = vmatpush1.msra.mxu0 %v375
        %394 = vmatprep.subr.mxu0 0.0
        %395 = vmatpush1.msra.mxu0 %v374
        %396 = vmatprep.subr.mxu0 0.0
        %397 = vmatpush1.msra.mxu0 %v373
        %398 = vmatprep.subr.mxu0 0.0
        %399 = vmatpush1.msra.mxu0 %v372
        %400 = vmatprep.subr.mxu0 0.0
        %401 = vmatpush1.msra.mxu0 %v371
        %402 = vmatprep.subr.mxu0 0.0
        %403 = vmatpush1.msra.mxu0 %v370
        %404 = vmatprep.subr.mxu0 0.0
        %405 = vmatpush1.msra.mxu0 %v369
        %406 = vmatprep.subr.mxu0 0.0
        %407 = vmatpush1.msra.mxu0 %v368
        %408 = vmatprep.subr.mxu0 0.0
        %409 = vmatpush1.msra.mxu0 %v367
        %410 = vmatprep.subr.mxu0 0.0
        %411 = vmatpush1.msra.mxu0 %v366
        %412 = vmatprep.subr.mxu0 0.0
        %413 = vmatpush1.msra.mxu0 %v365
        %414 = vmatprep.subr.mxu0 0.0
        %415 = vmatpush1.msra.mxu0 %v364
        %416 = vmatprep.subr.mxu0 0.0
        %417 = vmatpush1.msra.mxu0 %v363
        %418 = vmatprep.subr.mxu0 0.0
        %419 = vmatpush2.msra.mxu0 0.0
        %420 = vmatprep.subr.mxu0 0.0
        %421 = vmatpush2.msra.mxu0 0.0
        %422 = vmatprep.subr.mxu0 0.0
        %423 = vmatpush2.msra.mxu0 0.0
        %424 = vmatprep.subr.mxu0 0.0
        %425 = vmatpush2.msra.mxu0 0.0
        %426 = vmatprep.subr.mxu0 0.0
        %427 = vmatpush2.msra.mxu0 0.0
        %428 = vmatprep.subr.mxu0 0.0
        %429 = vmatpush2.msra.mxu0 0.0
        %430 = vmatprep.subr.mxu0 0.0
        %431 = vmatpush2.msra.mxu0 0.0
        %432 = vmatprep.subr.mxu0 0.0
        %433 = vmatpush2.msra.mxu0 0.0
        %434 = vmatprep.subr.mxu0 0.0
        %435 = vmatpush2.msra.mxu0 0.0
        %436 = vmatprep.subr.mxu0 0.0
        %437 = vmatpush2.msra.mxu0 0.0
        %438 = vmatprep.subr.mxu0 0.0
        %439 = vmatpush2.msra.mxu0 0.0
        %440 = vmatprep.subr.mxu0 0.0
        %441 = vmatpush2.msra.mxu0 0.0
        %442 = vmatprep.subr.mxu0 0.0
        %443 = vmatpush2.msra.mxu0 0.0
        %444 = vmatprep.subr.mxu0 0.0
        %445 = vmatpush2.msra.mxu0 0.0
        %446 = vmatprep.subr.mxu0 0.0
        %447 = vmatpush2.msra.mxu0 0.0
        %448 = vmatprep.subr.mxu0 0.0
        %449 = vmatpush2.msra.mxu0 0.0
        %450 = vmatprep.mubr.f32.mxu0 0.0
        %451 = vmatmul.mubr.f32.gmra.mxu0 %v359
        %v452 = vpop.f32.mrf.mxu0
        %v453 = vadd.f32 %v384, %v452
        %v454 = vpop.f32.mrf.mxu0
        %455 = vmatprep.mubr.f32.mxu0 0.0
        %456 = vmatmul.mubr.f32.gmra.mxu0 %v360
        %v457 = vpop.f32.mrf.mxu0
        %v458 = vadd.f32 %v384, %v457
        %v459 = vpop.f32.mrf.mxu0
        %460 = vmatprep.mubr.f32.mxu0 0.0
        %461 = vmatmul.mubr.f32.gmra.mxu0 %v361
        %v462 = vpop.f32.mrf.mxu0
        %v463 = vadd.f32 %v384, %v462
        %v464 = vpop.f32.mrf.mxu0
        %465 = vmatprep.mubr.f32.mxu0 0.0
        %466 = vmatmul.mubr.f32.gmra.mxu0 %v362
        %v467 = vpop.f32.mrf.mxu0
        %v468 = vadd.f32 %v384, %v467
        %v469 = vpop.f32.mrf.mxu0
        %470 = vdwg.mxu0
        %v471 = vmax.f32 %v453, 0.0
        %v472 = vmax.f32 %v458, 0.0
        %v473 = vmax.f32 %v463, 0.0
        %v474 = vmax.f32 %v468, 0.0
        %v475 = vld [vmem:[#allocation7] sm:$0xff]
        %v476 = vld [vmem:[#allocation7 + $0x8] sm:$0xff]
        %v477 = vld [vmem:[#allocation7 + $0x10] sm:$0xff]
        %v478 = vld [vmem:[#allocation7 + $0x18] sm:$0xff]
        %v479 = vld [vmem:[#allocation7 + $0x20] sm:$0xff]
        %v480 = vld [vmem:[#allocation7 + $0x28] sm:$0xff]
        %v481 = vld [vmem:[#allocation7 + $0x30] sm:$0xff]
        %v482 = vld [vmem:[#allocation7 + $0x38] sm:$0xff]
        %v483 = vld [vmem:[#allocation7 + $0x40] sm:$0xff]
        %v484 = vld [vmem:[#allocation7 + $0x48] sm:$0xff]
        %v485 = vld [vmem:[#allocation7 + $0x50] sm:$0xff]
        %v486 = vld [vmem:[#allocation7 + $0x58] sm:$0xff]
        %v487 = vld [vmem:[#allocation7 + $0x60] sm:$0xff]
        %v488 = vld [vmem:[#allocation7 + $0x68] sm:$0xff]
        %v489 = vld [vmem:[#allocation7 + $0x70] sm:$0xff]
        %v490 = vld [vmem:[#allocation7 + $0x78] sm:$0xff]
        %v491 = vld [vmem:[%s4] sm:$0x1]
        %v493 = vlaneseq
        %v494 = vshrl.u32 %v493, 7
        %v495 = vsub.s32 0, %v494
        %v496 = vrot.slane %v491, %v495
        %498 = vmatprep.subr.mxu0 0.0
        %499 = vmatpush1.msra.mxu0 %v490
        %500 = vmatprep.subr.mxu0 0.0
        %501 = vmatpush1.msra.mxu0 %v489
        %502 = vmatprep.subr.mxu0 0.0
        %503 = vmatpush1.msra.mxu0 %v488
        %504 = vmatprep.subr.mxu0 0.0
        %505 = vmatpush1.msra.mxu0 %v487
        %506 = vmatprep.subr.mxu0 0.0
        %507 = vmatpush1.msra.mxu0 %v486
        %508 = vmatprep.subr.mxu0 0.0
        %509 = vmatpush1.msra.mxu0 %v485
        %510 = vmatprep.subr.mxu0 0.0
        %511 = vmatpush1.msra.mxu0 %v484
        %512 = vmatprep.subr.mxu0 0.0
        %513 = vmatpush1.msra.mxu0 %v483
        %514 = vmatprep.subr.mxu0 0.0
        %515 = vmatpush1.msra.mxu0 %v482
        %516 = vmatprep.subr.mxu0 0.0
        %517 = vmatpush1.msra.mxu0 %v481
        %518 = vmatprep.subr.mxu0 0.0
        %519 = vmatpush1.msra.mxu0 %v480
        %520 = vmatprep.subr.mxu0 0.0
        %521 = vmatpush1.msra.mxu0 %v479
        %522 = vmatprep.subr.mxu0 0.0
        %523 = vmatpush1.msra.mxu0 %v478
        %524 = vmatprep.subr.mxu0 0.0
        %525 = vmatpush1.msra.mxu0 %v477
        %526 = vmatprep.subr.mxu0 0.0
        %527 = vmatpush1.msra.mxu0 %v476
        %528 = vmatprep.subr.mxu0 0.0
        %529 = vmatpush1.msra.mxu0 %v475
        %530 = vmatprep.subr.mxu0 0.0
        %531 = vmatpush2.msra.mxu0 0.0
        %532 = vmatprep.subr.mxu0 0.0
        %533 = vmatpush2.msra.mxu0 0.0
        %534 = vmatprep.subr.mxu0 0.0
        %535 = vmatpush2.msra.mxu0 0.0
        %536 = vmatprep.subr.mxu0 0.0
        %537 = vmatpush2.msra.mxu0 0.0
        %538 = vmatprep.subr.mxu0 0.0
        %539 = vmatpush2.msra.mxu0 0.0
        %540 = vmatprep.subr.mxu0 0.0
        %541 = vmatpush2.msra.mxu0 0.0
        %542 = vmatprep.subr.mxu0 0.0
        %543 = vmatpush2.msra.mxu0 0.0
        %544 = vmatprep.subr.mxu0 0.0
        %545 = vmatpush2.msra.mxu0 0.0
        %546 = vmatprep.subr.mxu0 0.0
        %547 = vmatpush2.msra.mxu0 0.0
        %548 = vmatprep.subr.mxu0 0.0
        %549 = vmatpush2.msra.mxu0 0.0
        %550 = vmatprep.subr.mxu0 0.0
        %551 = vmatpush2.msra.mxu0 0.0
        %552 = vmatprep.subr.mxu0 0.0
        %553 = vmatpush2.msra.mxu0 0.0
        %554 = vmatprep.subr.mxu0 0.0
        %555 = vmatpush2.msra.mxu0 0.0
        %556 = vmatprep.subr.mxu0 0.0
        %557 = vmatpush2.msra.mxu0 0.0
        %558 = vmatprep.subr.mxu0 0.0
        %559 = vmatpush2.msra.mxu0 0.0
        %560 = vmatprep.subr.mxu0 0.0
        %561 = vmatpush2.msra.mxu0 0.0
        %562 = vmatprep.mubr.f32.mxu0 0.0
        %563 = vmatmul.mubr.f32.gmra.mxu0 %v471
        %v564 = vpop.f32.mrf.mxu0
        %v565 = vadd.f32 %v496, %v564
        %v566 = vpop.f32.mrf.mxu0
        %567 = vmatprep.mubr.f32.mxu0 0.0
        %568 = vmatmul.mubr.f32.gmra.mxu0 %v472
        %v569 = vpop.f32.mrf.mxu0
        %v570 = vadd.f32 %v496, %v569
        %v571 = vpop.f32.mrf.mxu0
        %572 = vmatprep.mubr.f32.mxu0 0.0
        %573 = vmatmul.mubr.f32.gmra.mxu0 %v473
        %v574 = vpop.f32.mrf.mxu0
        %v575 = vadd.f32 %v496, %v574
        %v576 = vpop.f32.mrf.mxu0
        %577 = vmatprep.mubr.f32.mxu0 0.0
        %578 = vmatmul.mubr.f32.gmra.mxu0 %v474
        %v579 = vpop.f32.mrf.mxu0
        %v580 = vadd.f32 %v496, %v579
        %v581 = vpop.f32.mrf.mxu0
        %582 = vdwg.mxu0
        %v583 = vmax.f32 %v565, 0.0
        %v584 = vmax.f32 %v570, 0.0
        %v585 = vmax.f32 %v575, 0.0
        %v586 = vmax.f32 %v580, 0.0
        %v587 = vld [vmem:[#allocation8] sm:$0xff]
        %v588 = vld [vmem:[#allocation8 + $0x8] sm:$0xff]
        %v589 = vld [vmem:[#allocation8 + $0x10] sm:$0xff]
        %v590 = vld [vmem:[#allocation8 + $0x18] sm:$0xff]
        %v591 = vld [vmem:[#allocation8 + $0x20] sm:$0xff]
        %v592 = vld [vmem:[#allocation8 + $0x28] sm:$0xff]
        %v593 = vld [vmem:[#allocation8 + $0x30] sm:$0xff]
        %v594 = vld [vmem:[#allocation8 + $0x38] sm:$0xff]
        %v595 = vld [vmem:[#allocation8 + $0x40] sm:$0xff]
        %v596 = vld [vmem:[#allocation8 + $0x48] sm:$0xff]
        %v597 = vld [vmem:[#allocation8 + $0x50] sm:$0xff]
        %v598 = vld [vmem:[#allocation8 + $0x58] sm:$0xff]
        %v599 = vld [vmem:[#allocation8 + $0x60] sm:$0xff]
        %v600 = vld [vmem:[#allocation8 + $0x68] sm:$0xff]
        %v601 = vld [vmem:[#allocation8 + $0x70] sm:$0xff]
        %v602 = vld [vmem:[#allocation8 + $0x78] sm:$0xff]
        %v603 = vld [vmem:[%s6] sm:$0x1]
        %v605 = vlaneseq
        %v606 = vshrl.u32 %v605, 7
        %v607 = vsub.s32 0, %v606
        %v608 = vrot.slane %v603, %v607
        %610 = vmatprep.subr.mxu0 0.0
        %611 = vmatpush1.msra.mxu0 %v602
        %612 = vmatprep.subr.mxu0 0.0
        %613 = vmatpush1.msra.mxu0 %v601
        %614 = vmatprep.subr.mxu0 0.0
        %615 = vmatpush1.msra.mxu0 %v600
        %616 = vmatprep.subr.mxu0 0.0
        %617 = vmatpush1.msra.mxu0 %v599
        %618 = vmatprep.subr.mxu0 0.0
        %619 = vmatpush1.msra.mxu0 %v598
        %620 = vmatprep.subr.mxu0 0.0
        %621 = vmatpush1.msra.mxu0 %v597
        %622 = vmatprep.subr.mxu0 0.0
        %623 = vmatpush1.msra.mxu0 %v596
        %624 = vmatprep.subr.mxu0 0.0
        %625 = vmatpush1.msra.mxu0 %v595
        %626 = vmatprep.subr.mxu0 0.0
        %627 = vmatpush1.msra.mxu0 %v594
        %628 = vmatprep.subr.mxu0 0.0
        %629 = vmatpush1.msra.mxu0 %v593
        %630 = vmatprep.subr.mxu0 0.0
        %631 = vmatpush1.msra.mxu0 %v592
        %632 = vmatprep.subr.mxu0 0.0
        %633 = vmatpush1.msra.mxu0 %v591
        %634 = vmatprep.subr.mxu0 0.0
        %635 = vmatpush1.msra.mxu0 %v590
        %636 = vmatprep.subr.mxu0 0.0
        %637 = vmatpush1.msra.mxu0 %v589
        %638 = vmatprep.subr.mxu0 0.0
        %639 = vmatpush1.msra.mxu0 %v588
        %640 = vmatprep.subr.mxu0 0.0
        %641 = vmatpush1.msra.mxu0 %v587
        %642 = vmatprep.subr.mxu0 0.0
        %643 = vmatpush2.msra.mxu0 0.0
        %644 = vmatprep.subr.mxu0 0.0
        %645 = vmatpush2.msra.mxu0 0.0
        %646 = vmatprep.subr.mxu0 0.0
        %647 = vmatpush2.msra.mxu0 0.0
        %648 = vmatprep.subr.mxu0 0.0
        %649 = vmatpush2.msra.mxu0 0.0
        %650 = vmatprep.subr.mxu0 0.0
        %651 = vmatpush2.msra.mxu0 0.0
        %652 = vmatprep.subr.mxu0 0.0
        %653 = vmatpush2.msra.mxu0 0.0
        %654 = vmatprep.subr.mxu0 0.0
        %655 = vmatpush2.msra.mxu0 0.0
        %656 = vmatprep.subr.mxu0 0.0
        %657 = vmatpush2.msra.mxu0 0.0
        %658 = vmatprep.subr.mxu0 0.0
        %659 = vmatpush2.msra.mxu0 0.0
        %660 = vmatprep.subr.mxu0 0.0
        %661 = vmatpush2.msra.mxu0 0.0
        %662 = vmatprep.subr.mxu0 0.0
        %663 = vmatpush2.msra.mxu0 0.0
        %664 = vmatprep.subr.mxu0 0.0
        %665 = vmatpush2.msra.mxu0 0.0
        %666 = vmatprep.subr.mxu0 0.0
        %667 = vmatpush2.msra.mxu0 0.0
        %668 = vmatprep.subr.mxu0 0.0
        %669 = vmatpush2.msra.mxu0 0.0
        %670 = vmatprep.subr.mxu0 0.0
        %671 = vmatpush2.msra.mxu0 0.0
        %672 = vmatprep.subr.mxu0 0.0
        %673 = vmatpush2.msra.mxu0 0.0
        %674 = vmatprep.mubr.f32.mxu0 0.0
        %675 = vmatmul.mubr.f32.gmra.mxu0 %v583
        %v676 = vpop.f32.mrf.mxu0
        %v677 = vadd.f32 %v608, %v676
        %v678 = vpop.f32.mrf.mxu0
        %679 = vmatprep.mubr.f32.mxu0 0.0
        %680 = vmatmul.mubr.f32.gmra.mxu0 %v584
        %v681 = vpop.f32.mrf.mxu0
        %v682 = vadd.f32 %v608, %v681
        %v683 = vpop.f32.mrf.mxu0
        %684 = vmatprep.mubr.f32.mxu0 0.0
        %685 = vmatmul.mubr.f32.gmra.mxu0 %v585
        %v686 = vpop.f32.mrf.mxu0
        %v687 = vadd.f32 %v608, %v686
        %v688 = vpop.f32.mrf.mxu0
        %689 = vmatprep.mubr.f32.mxu0 0.0
        %690 = vmatmul.mubr.f32.gmra.mxu0 %v586
        %v691 = vpop.f32.mrf.mxu0
        %v692 = vadd.f32 %v608, %v691
        %v693 = vpop.f32.mrf.mxu0
        %694 = vdwg.mxu0
        %vm695 = vcmask 80896
        %696 = vst.msk [vmem:[%s343] sm:$0xff] %vm695, %v677
        %697 = vst.msk [vmem:[%s343 + $0x8] sm:$0xff] %vm695, %v682
        %698 = vst.msk [vmem:[%s343 + $0x10] sm:$0xff] %vm695, %v687
        %699 = vst.msk [vmem:[%s343 + $0x18] sm:$0xff] %vm695, %v692
        %s700 = smul.u32 4, %s23
        %p701 = scmp.lt.s32.totalorder %s700, 7
        %s702 = scalar_select %p701, %s700, 7
        %s703 = smul.addr %s702, 8
        %s704 = scalar_lea.vmem %s7, %s703
        // Predicated region
        $region65: #{gesture_net_forward.1} parent=47 // pred_check
          %p705 = pneg %p193
        $region66: #{gesture_net_forward.1} parent=47 // pred_check_branch
          %707 = sbr.rel (%p705) target = $region68
        $region67: #{gesture_net_forward.1} parent=47 // pred_region
          %s708 = smul.u32 4, %s23
        $region68: #{gesture_net_forward.1} parent=47 // pred_fallthru
          _
      $region48: #{gesture_net_forward.1} parent=5 // pred_fallthru
        _
      %p709 = scmp.le.s32.totalorder 2, %s18
      // Predicated region
      $region69: #{gesture_net_forward.1} parent=5 // pred_check
        %p710 = pneg %p709
      $region70: #{gesture_net_forward.1} parent=5 // pred_check_branch
        %712 = sbr.rel (%p710) target = $region72
      $region71: #{gesture_net_forward.1} parent=5 // pred_region
        %s713 = ssub.s32 %s18, 2
        // Predicated region
        $region73: #{gesture_net_forward.1} parent=71 // pred_check
          %p714 = pneg %p199
        $region74: #{gesture_net_forward.1} parent=71 // pred_check_branch
          %716 = sbr.rel (%p714) target = $region76
        $region75: #{gesture_net_forward.1} parent=71 // pred_region
          %s717 = smul.u32 4, %s24
          %p718 = scmp.lt.s32.totalorder %s717, 7
          %s719 = scalar_select %p718, %s717, 7
          %s720 = smul.addr %s719, 8
          %s721 = scalar_lea.vmem %s7, %s720
        $region76: #{gesture_net_forward.1} parent=71 // pred_fallthru
          _
      $region72: #{gesture_net_forward.1} parent=5 // pred_fallthru
        _
    $region6: #{gesture_net_forward.1} parent=1 // loop_footer
      %s22 = sadd.s32 1, %s18
    $region7: #{gesture_net_forward.1} parent=1 // loop_footer_branch
      %17 = sbr.rel target = $region3
    $region8: #{gesture_net_forward.1} parent=1 // loop_exit
      _
    %722 = vsyncpa [#allocation4], 1
    %s723 = scalar_lea.sflag [#allocation4], 1
    %724 = vsyncpa %s723, 1
    %725 = vsyncpa [#allocation6], 1
    %726 = vsyncpa [#allocation9], 1

</llo_original>
